<compile_context>
chip_gen: v7x
topology: tpu7x:2x2x1
jax: 0.10.0
libtpu: 0.0.40
codegen_flags: <defaults>
</compile_context>

<pallas_src>
import jax
import jax.numpy as jnp
from jax.experimental import pallas as pl
from jax.experimental.pallas import tpu as pltpu


# ----------------------------------------------------------------------------
# Kernels
# ----------------------------------------------------------------------------
def _ffn_resident_kernel(x_ref, w1_ref, b1_ref, w2_ref, b2_ref, o_ref):
    """Full-d_ff FFN for one row tile; weights resident across the whole grid."""
    # Cast x to the MXU compute dtype in-kernel (avoids an HBM bf16 copy of x).
    x = x_ref[...].astype(w1_ref.dtype)
    h = jnp.dot(x, w1_ref[...], preferred_element_type=jnp.float32)
    h = jnp.maximum(h + b1_ref[...], 0.0)
    # Hidden rounded to bf16 for the second MXU pass (deliberate precision choice).
    y = jnp.dot(h.astype(w2_ref.dtype), w2_ref[...],
                preferred_element_type=jnp.float32)
    o_ref[...] = (y + b2_ref[...]).astype(o_ref.dtype)


def _ffn_streamed_kernel_f32out(x_ref, w1_ref, b1_ref, w2_ref, b2_ref, o_ref):
    """d_ff streamed in k-slices; f32 output accumulated directly in o_ref."""
    k = pl.program_id(1)
    x = x_ref[...].astype(w1_ref.dtype)
    h = jnp.dot(x, w1_ref[...], preferred_element_type=jnp.float32)
    h = jnp.maximum(h + b1_ref[...], 0.0)
    contrib = jnp.dot(h.astype(w2_ref.dtype), w2_ref[...],
                      preferred_element_type=jnp.float32)

    @pl.when(k == 0)
    def _first():
        o_ref[...] = contrib + b2_ref[...]

    @pl.when(k > 0)
    def _rest():
        o_ref[...] += contrib


def _ffn_streamed_kernel_acc(x_ref, w1_ref, b1_ref, w2_ref, b2_ref, o_ref,
                             acc_ref):
    """d_ff streamed in k-slices; f32 scratch accumulator for narrow outputs."""
    k = pl.program_id(1)

    @pl.when(k == 0)
    def _init():
        acc_ref[...] = jnp.zeros_like(acc_ref)

    x = x_ref[...].astype(w1_ref.dtype)
    h = jnp.dot(x, w1_ref[...], preferred_element_type=jnp.float32)
    h = jnp.maximum(h + b1_ref[...], 0.0)
    acc_ref[...] += jnp.dot(h.astype(w2_ref.dtype), w2_ref[...],
                            preferred_element_type=jnp.float32)

    @pl.when(k == pl.num_programs(1) - 1)
    def _finalize():
        o_ref[...] = (acc_ref[...] + b2_ref[...]).astype(o_ref.dtype)


# ----------------------------------------------------------------------------
# Tiling helpers
# ----------------------------------------------------------------------------
def _cdiv(a, b):
    return -(-a // b)


def _round_up(a, b):
    return _cdiv(a, b) * b


def _round_down8(a):
    return max(8, (a // 8) * 8)


def _vmem_capacity_bytes():
    try:
        return int(pltpu.get_tpu_info().vmem_capacity_bytes)
    except Exception:
        return 64 * 1024 * 1024  # v7x-safe fallback


def _pick_tm(M, per_row_bytes, row_budget_bytes, tm_max=2048):
    """Largest multiple-of-8 row tile fitting the budget, with >=2 row tiles
    whenever M is large enough (keeps both v7x TensorCores busy)."""
    if M <= 16:
        return M
    cap = min(tm_max, _round_up(_cdiv(M, 2), 8), _round_up(M, 8))
    tm = _round_down8(cap)
    while tm > 8 and tm * per_row_bytes > row_budget_bytes:
        tm = _round_down8(tm // 2)
    return tm


def _pick_tk(d_ff, preferred):
    """Largest divisor of d_ff that is a multiple of 256 (v6e/v7x MXU) and
    <= preferred; falls back to 128-granularity (v5e), then full d_ff."""
    for gran in (256, 128):
        t = max(gran, (min(preferred, d_ff) // gran) * gran)
        while t >= gran:
            if d_ff % t == 0:
                return t
            t -= gran
    return d_ff


# ----------------------------------------------------------------------------
# Wrapper
# ----------------------------------------------------------------------------
def positionwise_ffn(x, w1, b1, w2, b2, *, compute_dtype=jnp.bfloat16,
                     tm=None, tk=512, force_streamed=False):
    """x: (B, S, d_model) -> (B, S, d_model).  y = relu(x@W1+b1)@W2+b2."""
    B, S, d_model = x.shape
    d_ff = w1.shape[1]
    out_dtype = x.dtype
    M = B * S

    # No pad, no bf16 HBM copy of x: the ragged last row block (if any) is
    # masked by Pallas on write, and the bf16 cast happens inside the kernel.
    x2 = x.reshape(M, d_model)

    w1c = w1.astype(compute_dtype)
    w2c = w2.astype(compute_dtype)
    b1_2 = b1.reshape(1, d_ff).astype(jnp.float32)
    b2_2 = b2.reshape(1, d_model).astype(jnp.float32)

    x_item = jnp.dtype(x2.dtype).itemsize
    out_item = jnp.dtype(out_dtype).itemsize
    w_item = jnp.dtype(compute_dtype).itemsize
    bias_bytes = (d_ff + d_model) * 4

    vmem_cap = _vmem_capacity_bytes()
    plan_budget = int(0.55 * vmem_cap)  # conservative planning budget

    # --- Resident-weights fast path -----------------------------------------
    # VMEM fixed cost: both weights (x2 for double-buffer headroom even though
    # constant-index blocks are fetched only once).
    resident_fixed = 2 * (2 * d_model * d_ff * w_item) + 2 * bias_bytes
    # Per-row VMEM cost: double-buffered x & out tiles + f32 hidden + bf16 hidden.
    per_row_res = d_model * 2 * (x_item + out_item) + d_ff * (4 + w_item)
    use_resident = (not force_streamed) and (
        resident_fixed + 128 * per_row_res <= plan_budget)

    if use_resident:
        if tm is None:
            tm_sel = _pick_tm(M, per_row_res, plan_budget - resident_fixed)
        else:
            tm_sel = M if tm >= M else _round_down8(min(tm, M))
        grid_i = _cdiv(M, tm_sel)

        footprint = resident_fixed + tm_sel * per_row_res
        vmem_limit = min(int(0.85 * vmem_cap),
                         max(32 * 1024 * 1024, footprint + 8 * 1024 * 1024))

        cost = pl.CostEstimate(
            flops=4 * M * d_model * d_ff,
            transcendentals=0,
            bytes_accessed=(M * d_model * (x_item + out_item)
                            + 2 * d_model * d_ff * w_item + bias_bytes),
        )

        out = pl.pallas_call(
            _ffn_resident_kernel,
            out_shape=jax.ShapeDtypeStruct((M, d_model), out_dtype),
            grid_spec=pltpu.PrefetchScalarGridSpec(
                num_scalar_prefetch=0,
                grid=(grid_i,),
                in_specs=[
                    pl.BlockSpec((tm_sel, d_model), lambda i: (i, 0)),   # x rows
                    pl.BlockSpec((d_model, d_ff), lambda i: (0, 0)),     # W1 (resident)
                    pl.BlockSpec((1, d_ff), lambda i: (0, 0)),           # b1 (resident)
                    pl.BlockSpec((d_ff, d_model), lambda i: (0, 0)),     # W2 (resident)
                    pl.BlockSpec((1, d_model), lambda i: (0, 0)),        # b2 (resident)
                ],
                out_specs=pl.BlockSpec((tm_sel, d_model), lambda i: (i, 0)),
            ),
            compiler_params=pltpu.CompilerParams(
                dimension_semantics=("parallel",),
                vmem_limit_bytes=vmem_limit,
            ),
            cost_estimate=cost,
        )(x2, w1c, b1_2, w2c, b2_2)
        return out.reshape(B, S, d_model)

    # --- Streamed-k fallback (very large d_ff) -------------------------------
    tk_sel = _pick_tk(d_ff, tk)
    grid_k = d_ff // tk_sel

    out_is_f32 = jnp.dtype(out_dtype) == jnp.dtype(jnp.float32)
    # Per-step fixed cost: double-buffered W1/W2 k-slices + biases.
    streamed_fixed = 2 * (2 * d_model * tk_sel * w_item) + 2 * bias_bytes
    per_row_str = (d_model * 2 * (x_item + out_item)
                   + tk_sel * (4 + w_item)
                   + (0 if out_is_f32 else d_model * 4))

    if tm is None:
        tm_sel = _pick_tm(M, per_row_str, plan_budget - streamed_fixed)
    else:
        tm_sel = M if tm >= M else _round_down8(min(tm, M))
    grid_i = _cdiv(M, tm_sel)

    footprint = streamed_fixed + tm_sel * per_row_str
    vmem_limit = min(int(0.85 * vmem_cap),
                     max(32 * 1024 * 1024, footprint + 8 * 1024 * 1024))

    cost = pl.CostEstimate(
        flops=4 * M * d_model * d_ff,
        transcendentals=0,
        bytes_accessed=(M * d_model * (x_item + out_item)
                        + grid_i * 2 * d_model * d_ff * w_item   # weight re-streaming
                        + bias_bytes),
    )

    in_specs = [
        pl.BlockSpec((tm_sel, d_model), lambda i, k: (i, 0)),   # x rows
        pl.BlockSpec((d_model, tk_sel), lambda i, k: (0, k)),   # W1 k-slice
        pl.BlockSpec((1, tk_sel), lambda i, k: (0, k)),         # b1 k-slice
        pl.BlockSpec((tk_sel, d_model), lambda i, k: (k, 0)),   # W2 k-slice
        pl.BlockSpec((1, d_model), lambda i, k: (0, 0)),        # b2
    ]
    out_spec = pl.BlockSpec((tm_sel, d_model), lambda i, k: (i, 0))

    if out_is_f32:
        kernel = _ffn_streamed_kernel_f32out
        scratch_shapes = []
    else:
        kernel = _ffn_streamed_kernel_acc
        scratch_shapes = [pltpu.VMEM((tm_sel, d_model), jnp.float32)]

    out = pl.pallas_call(
        kernel,
        out_shape=jax.ShapeDtypeStruct((M, d_model), out_dtype),
        grid_spec=pltpu.PrefetchScalarGridSpec(
            num_scalar_prefetch=0,
            grid=(grid_i, grid_k),
            in_specs=in_specs,
            out_specs=out_spec,
            scratch_shapes=scratch_shapes,
        ),
        compiler_params=pltpu.CompilerParams(
            dimension_semantics=("parallel", "arbitrary"),
            vmem_limit_bytes=vmem_limit,
        ),
        cost_estimate=cost,
    )(x2, w1c, b1_2, w2c, b2_2)
    return out.reshape(B, S, d_model)


# ----------------------------------------------------------------------------
# Params + demo
# ----------------------------------------------------------------------------
def init_params(key, d_model, d_ff, dtype=jnp.float32):
    """Deterministic init mimicking torch.nn.Linear (uniform +-1/sqrt(fan_in)).

    Stored as (in, out) so the kernel does x @ W (== x @ weight.T in PyTorch).
    """
    k1, k2, k3, k4 = jax.random.split(key, 4)
    lim1 = 1.0 / (d_model ** 0.5)
    lim2 = 1.0 / (d_ff ** 0.5)
    w1 = jax.random.uniform(k1, (d_model, d_ff), dtype, -lim1, lim1)
    b1 = jax.random.uniform(k2, (d_ff,), dtype, -lim1, lim1)
    w2 = jax.random.uniform(k3, (d_ff, d_model), dtype, -lim2, lim2)
    b2 = jax.random.uniform(k4, (d_model,), dtype, -lim2, lim2)
    return w1, b1, w2, b2


def _reference(x2d, w1, b1, w2, b2):
    # Plain-JAX reference with matching bf16 MXU-input precision (eval mode).
    xb = x2d.astype(jnp.bfloat16).astype(jnp.float32)
    w1b = w1.astype(jnp.bfloat16).astype(jnp.float32)
    w2b = w2.astype(jnp.bfloat16).astype(jnp.float32)
    h = jnp.maximum(xb @ w1b + b1, 0.0)
    return h.astype(jnp.bfloat16).astype(jnp.float32) @ w2b + b2


if __name__ == "__main__":
    key = jax.random.PRNGKey(0)
    kx1, kp1, kx2, kp2 = jax.random.split(key, 4)

    # Test 1: resident-weights path, ragged row count (M = 100 is not a
    # multiple of the row tile -> exercises masked last block).
    B, S, d_model, d_ff = 2, 50, 128, 256
    x = jax.random.normal(kx1, (B, S, d_model), jnp.float32)
    w1, b1, w2, b2 = init_params(kp1, d_model, d_ff)
    y = jax.block_until_ready(positionwise_ffn(x, w1, b1, w2, b2))
    assert y.shape == (B, S, d_model) and y.dtype == x.dtype
    ref = _reference(x.reshape(-1, d_model), w1, b1, w2, b2).reshape(B, S, d_model)
    assert jnp.allclose(y, ref, atol=2e-2, rtol=2e-2), (
        float(jnp.max(jnp.abs(y - ref))))

    # Test 2: streamed-k fallback (forced), 2 k-steps and 2 row tiles
    # (exercises the k-axis accumulation path with f32 output in o_ref).
    B2, S2, dm2, dff2 = 2, 64, 128, 512
    x_2 = jax.random.normal(kx2, (B2, S2, dm2), jnp.float32)
    w1_2, b1_2, w2_2, b2_2 = init_params(kp2, dm2, dff2)
    y2 = jax.block_until_ready(
        positionwise_ffn(x_2, w1_2, b1_2, w2_2, b2_2,
                         force_streamed=True, tk=256))
    assert y2.shape == (B2, S2, dm2) and y2.dtype == x_2.dtype
    ref2 = _reference(x_2.reshape(-1, dm2), w1_2, b1_2, w2_2, b2_2).reshape(B2, S2, dm2)
    assert jnp.allclose(y2, ref2, atol=2e-2, rtol=2e-2), (
        float(jnp.max(jnp.abs(y2 - ref2))))

    print("KERNEL_OK")
</pallas_src>

<mosaic_0001>
module attributes {stable_mosaic.version = 11 : i64} {
  func.func @_ffn_resident_kernel(%arg0: i32, %arg1: memref<56x128xf32, #tpu.memory_space<vmem>>, %arg2: memref<128x256xbf16, #tpu.memory_space<vmem>>, %arg3: memref<1x256xf32, #tpu.memory_space<vmem>>, %arg4: memref<256x128xbf16, #tpu.memory_space<vmem>>, %arg5: memref<1x128xf32, #tpu.memory_space<vmem>>, %arg6: memref<56x128xf32, #tpu.memory_space<vmem>>) attributes {dimension_semantics = [#tpu.dimension_semantics<parallel>], iteration_bounds = array<i64: 2>, scalar_prefetch = 0 : i64, scratch_operands = 0 : i64, tpu.core_type = #tpu.core_type<tc>, window_params = [{transform_indices = @transform_0, window_bounds = array<i64: 56, 128>}, {pipeline_mode = #tpu.pipeline_mode<synchronous>, transform_indices = @transform_1, window_bounds = array<i64: 128, 256>}, {pipeline_mode = #tpu.pipeline_mode<synchronous>, transform_indices = @transform_2, window_bounds = array<i64: 1, 256>}, {pipeline_mode = #tpu.pipeline_mode<synchronous>, transform_indices = @transform_3, window_bounds = array<i64: 256, 128>}, {pipeline_mode = #tpu.pipeline_mode<synchronous>, transform_indices = @transform_4, window_bounds = array<i64: 1, 128>}, {transform_indices = @transform_5, window_bounds = array<i64: 56, 128>}]} {
    %c0 = arith.constant 0 : index
    %c0_0 = arith.constant 0 : index
    %0 = vector.load %arg1[%c0, %c0_0] : memref<56x128xf32, #tpu.memory_space<vmem>>, vector<56x128xf32>
    %1 = arith.truncf %0 : vector<56x128xf32> to vector<56x128xbf16>
    %c0_1 = arith.constant 0 : index
    %c0_2 = arith.constant 0 : index
    %2 = vector.load %arg2[%c0_1, %c0_2] : memref<128x256xbf16, #tpu.memory_space<vmem>>, vector<128x256xbf16>
    %cst = arith.constant dense<0.000000e+00> : vector<56x256xf32>
    %3 = tpu.matmul %1, %2, %cst {dimension_numbers = #tpu.dot_dimension_numbers<[1], [0], [0], [1], [0, 0, 1, 1], [], []>} : vector<56x128xbf16>, vector<128x256xbf16>, vector<56x256xf32> -> vector<56x256xf32>
    %c0_3 = arith.constant 0 : index
    %c0_4 = arith.constant 0 : index
    %4 = vector.load %arg3[%c0_3, %c0_4] : memref<1x256xf32, #tpu.memory_space<vmem>>, vector<1x256xf32>
    %5 = vector.broadcast %4 : vector<1x256xf32> to vector<56x256xf32>
    %6 = arith.addf %3, %5 : vector<56x256xf32>
    %cst_5 = arith.constant 0.000000e+00 : f32
    %7 = vector.broadcast %cst_5 : f32 to vector<56x256xf32>
    %8 = arith.maximumf %6, %7 : vector<56x256xf32>
    %9 = arith.truncf %8 : vector<56x256xf32> to vector<56x256xbf16>
    %c0_6 = arith.constant 0 : index
    %c0_7 = arith.constant 0 : index
    %10 = vector.load %arg4[%c0_6, %c0_7] : memref<256x128xbf16, #tpu.memory_space<vmem>>, vector<256x128xbf16>
    %cst_8 = arith.constant dense<0.000000e+00> : vector<56x128xf32>
    %11 = tpu.matmul %9, %10, %cst_8 {dimension_numbers = #tpu.dot_dimension_numbers<[1], [0], [0], [1], [0, 0, 1, 1], [], []>} : vector<56x256xbf16>, vector<256x128xbf16>, vector<56x128xf32> -> vector<56x128xf32>
    %c0_9 = arith.constant 0 : index
    %c0_10 = arith.constant 0 : index
    %12 = vector.load %arg5[%c0_9, %c0_10] : memref<1x128xf32, #tpu.memory_space<vmem>>, vector<1x128xf32>
    %13 = vector.broadcast %12 : vector<1x128xf32> to vector<56x128xf32>
    %14 = arith.addf %11, %13 : vector<56x128xf32>
    %c0_11 = arith.constant 0 : index
    %c0_12 = arith.constant 0 : index
    %15 = vector.load %arg6[%c0_11, %c0_12] : memref<56x128xf32, #tpu.memory_space<vmem>>, vector<56x128xf32>
    tpu.vector_store %arg6[%c0_11, %c0_12], %14 {strides = array<i32>} : memref<56x128xf32, #tpu.memory_space<vmem>>, vector<56x128xf32>,
    return
  }
  func.func @transform_0(%arg0: i32) -> (i32, i32) {
    %c0_i32 = arith.constant 0 : i32
    %c0_i32_0 = arith.constant 0 : i32
    return %arg0, %c0_i32 : i32, i32
  }
  func.func @transform_1(%arg0: i32) -> (i32, i32) {
    %c0_i32 = arith.constant 0 : i32
    %c0_i32_0 = arith.constant 0 : i32
    %c0_i32_1 = arith.constant 0 : i32
    return %c0_i32, %c0_i32_0 : i32, i32
  }
  func.func @transform_2(%arg0: i32) -> (i32, i32) {
    %c0_i32 = arith.constant 0 : i32
    %c0_i32_0 = arith.constant 0 : i32
    %c0_i32_1 = arith.constant 0 : i32
    return %c0_i32, %c0_i32_0 : i32, i32
  }
  func.func @transform_3(%arg0: i32) -> (i32, i32) {
    %c0_i32 = arith.constant 0 : i32
    %c0_i32_0 = arith.constant 0 : i32
    %c0_i32_1 = arith.constant 0 : i32
    return %c0_i32, %c0_i32_0 : i32, i32
  }
  func.func @transform_4(%arg0: i32) -> (i32, i32) {
    %c0_i32 = arith.constant 0 : i32
    %c0_i32_0 = arith.constant 0 : i32
    %c0_i32_1 = arith.constant 0 : i32
    return %c0_i32, %c0_i32_0 : i32, i32
  }
  func.func @transform_5(%arg0: i32) -> (i32, i32) {
    %c0_i32 = arith.constant 0 : i32
    %c0_i32_0 = arith.constant 0 : i32
    return %arg0, %c0_i32 : i32, i32
  }
}

</mosaic_0001>

<llo_original>
// kernel: tpu_custom_call.1
$region0: #{tpu_custom_call.1}
  #allocation0 [shape = 'u32[]', space=smem, size = 0x4, offset = 0x4, fixed_abs, tag = 'smem constant byte address 0x4 - core index']
  #allocation1 [shape = 'u32[144,128]{1,0:T(1,128)}', space=vmem, size = 0x12000, scoped, tag = 'internal scratch']
  %s0 = inlined_call_operand.hbm [shape: f32[100,128], index: 0, kind: input, shape index: {}]
  %s1 = inlined_call_operand.hbm [shape: bf16[128,256], index: 1, kind: input, shape index: {}]
  %s2 = inlined_call_operand.vmem [shape: f32[1,256], index: 2, kind: input, shape index: {}]
  %s3 = inlined_call_operand.hbm [shape: bf16[256,128], index: 3, kind: input, shape index: {}]
  %s4 = inlined_call_operand.vmem [shape: f32[1,128], index: 4, kind: input, shape index: {}]
  %s5 = inlined_call_operand.hbm [shape: f32[100,128], index: 5, kind: output, shape index: {}]
  %s6 = sld [smem:[#allocation0]]
  $region65: #{tpu_custom_call.1} parent=0
    _
  %s8 = ssub.s32 1, %s6
  %s9 = scalar_select 0, %s8, %s6
  $region1: #{tpu_custom_call.1} parent=0
    #allocation2 [shape = 'u8[57344]{0}', space=vmem, size = 0xe000, scoped, tag = 'input window, operand 0']
    #allocation3 [shape = 's32[2]{0}', space=sflag, size = 0x8, scoped, tag = 'scoped memory for tpu_custom_call.1']
    #allocation4 [shape = 's32[2]{0}', space=sflag, size = 0x8, scoped, tag = 'scoped memory for tpu_custom_call.1']
    #allocation5 [shape = 'u8[65536]{0}', space=vmem, size = 0x10000, scoped, tag = 'input window, operand 1, single buffered']
    #allocation6 [shape = 's32[1]{0}', space=sflag, size = 0x4, scoped, tag = 'scoped memory for tpu_custom_call.1']
    #allocation7 [shape = 'u8[65536]{0}', space=vmem, size = 0x10000, scoped, tag = 'input window, operand 3, single buffered']
    #allocation8 [shape = 'u8[57344]{0}', space=vmem, size = 0xe000, scoped, tag = 'output window, operand 0']
    %10 = vsyncpa [#allocation3], 0
    %s11 = scalar_lea.sflag [#allocation3], 1
    %12 = vsyncpa %s11, 0
    %13 = vsyncpa [#allocation6], 0
    %14 = vsyncpa [#allocation4], 0
    %s15 = scalar_lea.sflag [#allocation4], 1
    %16 = vsyncpa %s15, 0
    loop: start=0, step=1, limit=4
    $region2: #{tpu_custom_call.1} parent=1 // loop_pre_header
      _
    $region3: #{tpu_custom_call.1} parent=1 // loop_header
      %s18 = sphi 0, %s22
      %p19 = scmp.ge.s32.totalorder %s18, 4
      %s28 = sphi 0, %s30
      %s31 = sphi 0, %s28
      %s32 = sphi 0, %s31
      %s48 = sphi 0, %s32
      %s52 = sphi 0, %s52
      %s54 = sphi 0, %s52
      %s55 = sphi 0, %s54
      %s69 = sphi 0, %s55
      %s73 = sphi 0, %s73
      %s75 = sphi 0, %s73
      %s76 = sphi 0, %s75
      %s90 = sphi 0, %s76
      %s94 = sphi 0, %s94
      %s96 = sphi 0, %s94
      %s97 = sphi 0, %s96
      %s111 = sphi 0, %s97
      %s115 = sphi 0, %s115
      %s117 = sphi 0, %s115
      %s118 = sphi 0, %s117
      %s132 = sphi 0, %s118
      %s138 = sphi 0, %s140
      %s141 = sphi 0, %s138
      %s142 = sphi 0, %s141
      %s158 = sphi 0, %s142
    $region4: #{tpu_custom_call.1} parent=1 // loop_header_branch
      %21 = sbr.rel (%p19) target = $region8
    $region5: #{tpu_custom_call.1} parent=1 // loop_body
      %s23 = ssub.s32 %s18, 1
      %s24 = ssub.s32 %s18, 2
      %s25 = sadd.s32 %s18, 1
      %s26 = ssub.s32 %s18, %s25
      %p27 = scmp.eq.s32.totalorder %s26, 0
      %s29 = sadd.s32 %s28, 1
      %s30 = scalar_select %p27, %s28, %s29
      %p33 = pneg %p27
      %p34 = scmp.eq.s32.totalorder %s18, 1
      %p35 = por %p33, %p34
      %p36 = scmp.ne.s32.totalorder %s28, %s31
      %p37 = scmp.eq.s32.totalorder %s18, 0
      %p38 = por %p36, %p37
      %p39 = scmp.ne.s32.totalorder %s28, %s31
      %p40 = scmp.eq.s32.totalorder %s23, 1
      %p41 = por %p39, %p40
      %p42 = scmp.ne.s32.totalorder %s31, %s32
      %p43 = scmp.eq.s32.totalorder %s23, 0
      %p44 = por %p42, %p43
      %p45 = scmp.ne.s32.totalorder %s31, %s32
      %p46 = scmp.eq.s32.totalorder %s24, 1
      %p47 = por %p45, %p46
      %p49 = scmp.ne.s32.totalorder %s32, %s48
      %p50 = scmp.eq.s32.totalorder %s24, 0
      %p51 = por %p49, %p50
      %s53 = sadd.s32 %s52, 1
      %p56 = scmp.eq.s32.totalorder %s18, 1
      %p57 = scmp.ne.s32.totalorder %s52, %s54
      %p58 = scmp.eq.s32.totalorder %s18, 0
      %p59 = por %p57, %p58
      %p60 = scmp.ne.s32.totalorder %s52, %s54
      %p61 = scmp.eq.s32.totalorder %s23, 1
      %p62 = por %p60, %p61
      %p63 = scmp.ne.s32.totalorder %s54, %s55
      %p64 = scmp.eq.s32.totalorder %s23, 0
      %p65 = por %p63, %p64
      %p66 = scmp.ne.s32.totalorder %s54, %s55
      %p67 = scmp.eq.s32.totalorder %s24, 1
      %p68 = por %p66, %p67
      %p70 = scmp.ne.s32.totalorder %s55, %s69
      %p71 = scmp.eq.s32.totalorder %s24, 0
      %p72 = por %p70, %p71
      %s74 = sadd.s32 %s73, 1
      %p77 = scmp.eq.s32.totalorder %s18, 1
      %p78 = scmp.ne.s32.totalorder %s73, %s75
      %p79 = scmp.eq.s32.totalorder %s18, 0
      %p80 = por %p78, %p79
      %p81 = scmp.ne.s32.totalorder %s73, %s75
      %p82 = scmp.eq.s32.totalorder %s23, 1
      %p83 = por %p81, %p82
      %p84 = scmp.ne.s32.totalorder %s75, %s76
      %p85 = scmp.eq.s32.totalorder %s23, 0
      %p86 = por %p84, %p85
      %p87 = scmp.ne.s32.totalorder %s75, %s76
      %p88 = scmp.eq.s32.totalorder %s24, 1
      %p89 = por %p87, %p88
      %p91 = scmp.ne.s32.totalorder %s76, %s90
      %p92 = scmp.eq.s32.totalorder %s24, 0
      %p93 = por %p91, %p92
      %s95 = sadd.s32 %s94, 1
      %p98 = scmp.eq.s32.totalorder %s18, 1
      %p99 = scmp.ne.s32.totalorder %s94, %s96
      %p100 = scmp.eq.s32.totalorder %s18, 0
      %p101 = por %p99, %p100
      %p102 = scmp.ne.s32.totalorder %s94, %s96
      %p103 = scmp.eq.s32.totalorder %s23, 1
      %p104 = por %p102, %p103
      %p105 = scmp.ne.s32.totalorder %s96, %s97
      %p106 = scmp.eq.s32.totalorder %s23, 0
      %p107 = por %p105, %p106
      %p108 = scmp.ne.s32.totalorder %s96, %s97
      %p109 = scmp.eq.s32.totalorder %s24, 1
      %p110 = por %p108, %p109
      %p112 = scmp.ne.s32.totalorder %s97, %s111
      %p113 = scmp.eq.s32.totalorder %s24, 0
      %p114 = por %p112, %p113
      %s116 = sadd.s32 %s115, 1
      %p119 = scmp.eq.s32.totalorder %s18, 1
      %p120 = scmp.ne.s32.totalorder %s115, %s117
      %p121 = scmp.eq.s32.totalorder %s18, 0
      %p122 = por %p120, %p121
      %p123 = scmp.ne.s32.totalorder %s115, %s117
      %p124 = scmp.eq.s32.totalorder %s23, 1
      %p125 = por %p123, %p124
      %p126 = scmp.ne.s32.totalorder %s117, %s118
      %p127 = scmp.eq.s32.totalorder %s23, 0
      %p128 = por %p126, %p127
      %p129 = scmp.ne.s32.totalorder %s117, %s118
      %p130 = scmp.eq.s32.totalorder %s24, 1
      %p131 = por %p129, %p130
      %p133 = scmp.ne.s32.totalorder %s118, %s132
      %p134 = scmp.eq.s32.totalorder %s24, 0
      %p135 = por %p133, %p134
      %s136 = ssub.s32 %s18, %s25
      %p137 = scmp.eq.s32.totalorder %s136, 0
      %s139 = sadd.s32 %s138, 1
      %s140 = scalar_select %p137, %s138, %s139
      %p143 = pneg %p137
      %p144 = scmp.eq.s32.totalorder %s18, 1
      %p145 = por %p143, %p144
      %p146 = scmp.ne.s32.totalorder %s138, %s141
      %p147 = scmp.eq.s32.totalorder %s18, 0
      %p148 = por %p146, %p147
      %p149 = scmp.ne.s32.totalorder %s138, %s141
      %p150 = scmp.eq.s32.totalorder %s23, 1
      %p151 = por %p149, %p150
      %p152 = scmp.ne.s32.totalorder %s141, %s142
      %p153 = scmp.eq.s32.totalorder %s23, 0
      %p154 = por %p152, %p153
      %p155 = scmp.ne.s32.totalorder %s141, %s142
      %p156 = scmp.eq.s32.totalorder %s24, 1
      %p157 = por %p155, %p156
      %p159 = scmp.ne.s32.totalorder %s142, %s158
      %p160 = scmp.eq.s32.totalorder %s24, 0
      %p161 = por %p159, %p160
      %p162 = scmp.le.s32.totalorder 1, %s18
      %p163 = scmp.lt.s32.totalorder %s18, 3
      %p164 = pnand %p162, %p163
      %p165 = pneg %p164
      // Predicated region
      $region9: #{tpu_custom_call.1} parent=5 // pred_check
        _
      $region10: #{tpu_custom_call.1} parent=5 // pred_check_branch
        %167 = sbr.rel (%p164) target = $region12
      $region11: #{tpu_custom_call.1} parent=5 // pred_region
        %s168 = ssub.s32 %s18, 1
        // Predicated region
        $region13: #{tpu_custom_call.1} parent=11 // pred_check
          %p169 = pneg %p65
        $region14: #{tpu_custom_call.1} parent=11 // pred_check_branch
          %171 = sbr.rel (%p169) target = $region16
        $region15: #{tpu_custom_call.1} parent=11 // pred_region
          %s173 = ssub.s32 2048, 2048
          %174 = vsyncadd [#allocation6], %s173
          %s175 = sshll.u32 [#allocation5], 4
          %s176 = int_to_ptr.vmem [resolvable:$true] %s175
          %181 = dma.hbm_to_vmem [thread:$0]  %s1, 2048, %s176, [#allocation6], 128, 128, 8
        $region16: #{tpu_custom_call.1} parent=11 // pred_fallthru
          _
        // Predicated region
        $region17: #{tpu_custom_call.1} parent=11 // pred_check
          %p182 = pneg %p86
        $region18: #{tpu_custom_call.1} parent=11 // pred_check_branch
          %184 = sbr.rel (%p182) target = $region20
        $region19: #{tpu_custom_call.1} parent=11 // pred_region
          _
        $region20: #{tpu_custom_call.1} parent=11 // pred_fallthru
          _
        // Predicated region
        $region21: #{tpu_custom_call.1} parent=11 // pred_check
          %p185 = pneg %p107
        $region22: #{tpu_custom_call.1} parent=11 // pred_check_branch
          %187 = sbr.rel (%p185) target = $region24
        $region23: #{tpu_custom_call.1} parent=11 // pred_region
          %s189 = ssub.s32 2048, 2048
          %190 = vsyncadd [#allocation6], %s189
          %s191 = sshll.u32 [#allocation7], 4
          %s192 = int_to_ptr.vmem [resolvable:$true] %s191
          %197 = dma.hbm_to_vmem [thread:$0]  %s3, 2048, %s192, [#allocation6], 64, 64, 4
        $region24: #{tpu_custom_call.1} parent=11 // pred_fallthru
          _
        // Predicated region
        $region25: #{tpu_custom_call.1} parent=11 // pred_check
          %p198 = pneg %p128
        $region26: #{tpu_custom_call.1} parent=11 // pred_check_branch
          %200 = sbr.rel (%p198) target = $region28
        $region27: #{tpu_custom_call.1} parent=11 // pred_region
          _
        $region28: #{tpu_custom_call.1} parent=11 // pred_fallthru
          _
      $region12: #{tpu_custom_call.1} parent=5 // pred_fallthru
        _
      %p201 = scmp.lt.s32.totalorder %s18, 2
      // Predicated region
      $region29: #{tpu_custom_call.1} parent=5 // pred_check
        %p202 = pneg %p201
      $region30: #{tpu_custom_call.1} parent=5 // pred_check_branch
        %204 = sbr.rel (%p202) target = $region32
      $region31: #{tpu_custom_call.1} parent=5 // pred_region
        // Predicated region
        $region33: #{tpu_custom_call.1} parent=31 // pred_check
          %p205 = pneg %p38
        $region34: #{tpu_custom_call.1} parent=31 // pred_check_branch
          %207 = sbr.rel (%p205) target = $region36
        $region35: #{tpu_custom_call.1} parent=31 // pred_region
          %s208 = sand.u32 %s28, 1
          %s209 = scalar_lea.sflag [#allocation3], %s208
          %s210 = sand.u32 %s28, 1
          %s211 = smul.addr %s210, 56
          %s212 = scalar_lea.vmem [#allocation2], %s211
          %s213 = smul.u32 7, %s18
          %s214 = ssub.s32 13, %s213
          %p215 = scmp.lt.s32.totalorder %s214, 7
          %s216 = scalar_select %p215, %s214, 7
          %s217 = smul.u32 128, %s216
          %s219 = ssub.s32 896, %s217
          %220 = vsyncadd %s209, %s219
          %p221 = scmp.ne.s32.totalorder 0, %s217
          %s222 = smul.addr %s213, 128
          %s223 = scalar_lea.hbm %s0, %s222
          %s224 = smul.u32 8, %s216
          %s225 = sshll.u32 %s212, 4
          %s226 = int_to_ptr.vmem [resolvable:$true] %s225
          %s227 = sshll.u32 %s224, 4
          %231 = dma.hbm_to_vmem [thread:$0]  (%p221), %s223, %s227, %s226, %s209, 128, 128, 8
        $region36: #{tpu_custom_call.1} parent=31 // pred_fallthru
          _
      $region32: #{tpu_custom_call.1} parent=5 // pred_fallthru
        _
      %p232 = scmp.le.s32.totalorder 1, %s18
      %p233 = scmp.lt.s32.totalorder %s18, 3
      %p234 = pnand %p232, %p233
      %p235 = pneg %p234
      // Predicated region
      $region37: #{tpu_custom_call.1} parent=5 // pred_check
        _
      $region38: #{tpu_custom_call.1} parent=5 // pred_check_branch
        %237 = sbr.rel (%p234) target = $region40
      $region39: #{tpu_custom_call.1} parent=5 // pred_region
        %s238 = ssub.s32 %s18, 1
        %s239 = sand.u32 %s31, 1
        %s240 = scalar_lea.sflag [#allocation3], %s239
        %s241 = sand.u32 %s31, 1
        %s242 = smul.addr %s241, 56
        %s243 = scalar_lea.vmem [#allocation2], %s242
        // Predicated region
        $region41: #{tpu_custom_call.1} parent=39 // pred_check
          %p244 = pneg %p44
        $region42: #{tpu_custom_call.1} parent=39 // pred_check_branch
          %246 = sbr.rel (%p244) target = $region44
        $region43: #{tpu_custom_call.1} parent=39 // pred_region
          %247 = dma.done %s240, 896
        $region44: #{tpu_custom_call.1} parent=39 // pred_fallthru
          _
        // Predicated region
        $region45: #{tpu_custom_call.1} parent=39 // pred_check
          %p248 = pneg %p65
        $region46: #{tpu_custom_call.1} parent=39 // pred_check_branch
          %250 = sbr.rel (%p248) target = $region48
        $region47: #{tpu_custom_call.1} parent=39 // pred_region
          %251 = dma.done [#allocation6], 2048
        $region48: #{tpu_custom_call.1} parent=39 // pred_fallthru
          _
        // Predicated region
        $region49: #{tpu_custom_call.1} parent=39 // pred_check
          %p252 = pneg %p107
        $region50: #{tpu_custom_call.1} parent=39 // pred_check_branch
          %254 = sbr.rel (%p252) target = $region52
        $region51: #{tpu_custom_call.1} parent=39 // pred_region
          %255 = dma.done [#allocation6], 2048
        $region52: #{tpu_custom_call.1} parent=39 // pred_fallthru
          _
        %s256 = sand.u32 %s31, 1
        %s257 = scalar_lea.sflag [#allocation3], %s256
        %s258 = sand.u32 %s31, 1
        %s259 = smul.addr %s258, 56
        %s260 = scalar_lea.vmem [#allocation2], %s259
        %p261 = pneg %p44
        %p262 = pneg %p41
        %p263 = pneg %p65
        %p264 = pneg %p62
        %p265 = pneg %p86
        %p266 = pneg %p83
        %p267 = pneg %p107
        %p268 = pneg %p104
        %p269 = pneg %p128
        %p270 = pneg %p125
        %p271 = pneg %p154
        %p272 = pneg %p151
        %s273 = sand.u32 %s141, 1
        %s274 = scalar_lea.sflag [#allocation4], %s273
        %s275 = sand.u32 %s141, 1
        %s276 = smul.addr %s275, 56
        %s277 = scalar_lea.vmem [#allocation8], %s276
        %s278 = smul.u32 7, %s23
        %s279 = ssub.s32 13, %s278
        %p280 = scmp.lt.s32.totalorder %s279, 7
        %s281 = scalar_select %p280, %s279, 7
        %s282 = smul.u32 128, %s281
        %s283 = smul.u32 7, %s23
        %s284 = ssub.s32 13, %s283
        %p285 = scmp.lt.s32.totalorder %s284, 7
        %s286 = scalar_select %p285, %s284, 7
        %s287 = smul.u32 128, %s286
        %v289 = vld [vmem:[%s243] sm:$0xff]
        %v290 = vld [vmem:[%s243 + $0x8] sm:$0xff]
        %v291 = vld [vmem:[%s243 + $0x10] sm:$0xff]
        %v292 = vld [vmem:[%s243 + $0x18] sm:$0xff]
        %v293 = vld [vmem:[%s243 + $0x20] sm:$0xff]
        %v294 = vld [vmem:[%s243 + $0x28] sm:$0xff]
        %v295 = vld [vmem:[%s243 + $0x30] sm:$0xff]
        %v296 = vpack.c.bf16 %v290, %v289
        %v297 = vpack.c.bf16 %v292, %v291
        %v298 = vpack.c.bf16 %v294, %v293
        %v299 = vpack.c.bf16 %v295, %v295
        %v300 = vld [vmem:[#allocation5] sm:$0xff]
        %v301 = vld [vmem:[#allocation5 + $0x8] sm:$0xff]
        %v302 = vld [vmem:[#allocation5 + $0x10] sm:$0xff]
        %v303 = vld [vmem:[#allocation5 + $0x18] sm:$0xff]
        %v304 = vld [vmem:[#allocation5 + $0x20] sm:$0xff]
        %v305 = vld [vmem:[#allocation5 + $0x28] sm:$0xff]
        %v306 = vld [vmem:[#allocation5 + $0x30] sm:$0xff]
        %v307 = vld [vmem:[#allocation5 + $0x38] sm:$0xff]
        %v308 = vld [vmem:[#allocation5 + $0x40] sm:$0xff]
        %v309 = vld [vmem:[#allocation5 + $0x48] sm:$0xff]
        %v310 = vld [vmem:[#allocation5 + $0x50] sm:$0xff]
        %v311 = vld [vmem:[#allocation5 + $0x58] sm:$0xff]
        %v312 = vld [vmem:[#allocation5 + $0x60] sm:$0xff]
        %v313 = vld [vmem:[#allocation5 + $0x68] sm:$0xff]
        %v314 = vld [vmem:[#allocation5 + $0x70] sm:$0xff]
        %v315 = vld [vmem:[#allocation5 + $0x78] sm:$0xff]
        %v316 = vld [vmem:[%s2] sm:$0x3]
        %v318 = vlaneseq
        %v319 = vshrl.u32 %v318, 7
        %v320 = vsub.s32 0, %v319
        %v321 = vrot.slane %v316, %v320
        %v322 = vlaneseq
        %v323 = vshrl.u32 %v322, 7
        %v324 = vsub.s32 1, %v323
        %v325 = vrot.slane %v316, %v324
        %v344 = vunpack.c.l.b16 %v300
        %v345 = vunpack.c.h.b16 %v300
        %v346 = vunpack.c.l.b16 %v301
        %v347 = vunpack.c.h.b16 %v301
        %v348 = vunpack.c.l.b16 %v302
        %v349 = vunpack.c.h.b16 %v302
        %v350 = vunpack.c.l.b16 %v303
        %v351 = vunpack.c.h.b16 %v303
        %v352 = vunpack.c.l.b16 %v304
        %v353 = vunpack.c.h.b16 %v304
        %v354 = vunpack.c.l.b16 %v305
        %v355 = vunpack.c.h.b16 %v305
        %v356 = vunpack.c.l.b16 %v306
        %v357 = vunpack.c.h.b16 %v306
        %v358 = vunpack.c.l.b16 %v307
        %v359 = vunpack.c.h.b16 %v307
        %v360 = vunpack.c.l.b16 %v308
        %v361 = vunpack.c.h.b16 %v308
        %v362 = vunpack.c.l.b16 %v309
        %v363 = vunpack.c.h.b16 %v309
        %v364 = vunpack.c.l.b16 %v310
        %v365 = vunpack.c.h.b16 %v310
        %v366 = vunpack.c.l.b16 %v311
        %v367 = vunpack.c.h.b16 %v311
        %v368 = vunpack.c.l.b16 %v312
        %v369 = vunpack.c.h.b16 %v312
        %v370 = vunpack.c.l.b16 %v313
        %v371 = vunpack.c.h.b16 %v313
        %v372 = vunpack.c.l.b16 %v314
        %v373 = vunpack.c.h.b16 %v314
        %v374 = vunpack.c.l.b16 %v315
        %v375 = vunpack.c.h.b16 %v315
        %v376 = vpack.c.b16 %v346, %v344
        %v377 = vpack.c.b16 %v347, %v345
        %v378 = vpack.c.b16 %v350, %v348
        %v379 = vpack.c.b16 %v351, %v349
        %v380 = vpack.c.b16 %v354, %v352
        %v381 = vpack.c.b16 %v355, %v353
        %v382 = vpack.c.b16 %v358, %v356
        %v383 = vpack.c.b16 %v359, %v357
        %v384 = vpack.c.b16 %v362, %v360
        %v385 = vpack.c.b16 %v363, %v361
        %v386 = vpack.c.b16 %v366, %v364
        %v387 = vpack.c.b16 %v367, %v365
        %v388 = vpack.c.b16 %v370, %v368
        %v389 = vpack.c.b16 %v371, %v369
        %v390 = vpack.c.b16 %v374, %v372
        %v391 = vpack.c.b16 %v375, %v373
        %408 = vmatprep.subr.bf16.mxu0 %v377
        %409 = vmatpush1.bf16.msra.mxu0 %v376
        %410 = vmatprep.subr.bf16.mxu0 %v379
        %411 = vmatpush1.bf16.msra.mxu0 %v378
        %412 = vmatprep.subr.bf16.mxu0 %v381
        %413 = vmatpush1.bf16.msra.mxu0 %v380
        %414 = vmatprep.subr.bf16.mxu0 %v383
        %415 = vmatpush1.bf16.msra.mxu0 %v382
        %416 = vmatprep.subr.bf16.mxu0 %v385
        %417 = vmatpush1.bf16.msra.mxu0 %v384
        %418 = vmatprep.subr.bf16.mxu0 %v387
        %419 = vmatpush1.bf16.msra.mxu0 %v386
        %420 = vmatprep.subr.bf16.mxu0 %v389
        %421 = vmatpush1.bf16.msra.mxu0 %v388
        %422 = vmatprep.subr.bf16.mxu0 %v391
        %423 = vmatpush1.bf16.msra.mxu0 %v390
        %424 = vmatprep.subr.bf16.mxu0 0
        %425 = vmatpush1.bf16.msra.mxu0 0
        %426 = vmatprep.subr.bf16.mxu0 0
        %427 = vmatpush1.bf16.msra.mxu0 0
        %428 = vmatprep.subr.bf16.mxu0 0
        %429 = vmatpush1.bf16.msra.mxu0 0
        %430 = vmatprep.subr.bf16.mxu0 0
        %431 = vmatpush1.bf16.msra.mxu0 0
        %432 = vmatprep.subr.bf16.mxu0 0
        %433 = vmatpush1.bf16.msra.mxu0 0
        %434 = vmatprep.subr.bf16.mxu0 0
        %435 = vmatpush1.bf16.msra.mxu0 0
        %436 = vmatprep.subr.bf16.mxu0 0
        %437 = vmatpush1.bf16.msra.mxu0 0
        %438 = vmatprep.subr.bf16.mxu0 0
        %439 = vmatpush1.bf16.msra.mxu0 0
        %440 = vmatprep.mubr.bf16.mxu0 0
        %441 = vmatmul.mubr.bf16.gmra.mrb[0].mxu0 %v296
        %v442 = vpop.f32.mrb[0].mxu0
        %v443 = vadd.f32 %v321, %v442
        %v444 = vpop.f32.mrb[0].mxu0
        %v445 = vadd.f32 %v325, %v444
        %v446 = vpop.f32.mrb[0].mxu0
        %v447 = vadd.f32 %v321, %v446
        %v448 = vpop.f32.mrb[0].mxu0
        %v449 = vadd.f32 %v325, %v448
        %450 = vmatprep.mubr.bf16.mxu0 0
        %451 = vmatmul.mubr.bf16.gmra.mrb[0].mxu0 %v297
        %v452 = vpop.f32.mrb[0].mxu0
        %v453 = vadd.f32 %v321, %v452
        %v454 = vpop.f32.mrb[0].mxu0
        %v455 = vadd.f32 %v325, %v454
        %v456 = vpop.f32.mrb[0].mxu0
        %v457 = vadd.f32 %v321, %v456
        %v458 = vpop.f32.mrb[0].mxu0
        %v459 = vadd.f32 %v325, %v458
        %460 = vmatprep.mubr.bf16.mxu0 0
        %461 = vmatmul.mubr.bf16.gmra.mrb[0].mxu0 %v298
        %v462 = vpop.f32.mrb[0].mxu0
        %v463 = vadd.f32 %v321, %v462
        %v464 = vpop.f32.mrb[0].mxu0
        %v465 = vadd.f32 %v325, %v464
        %v466 = vpop.f32.mrb[0].mxu0
        %v467 = vadd.f32 %v321, %v466
        %v468 = vpop.f32.mrb[0].mxu0
        %v469 = vadd.f32 %v325, %v468
        %470 = vmatprep.mubr.bf16.mxu0 0
        %471 = vmatmul.mubr.bf16.gmra.mrb[0].mxu0 %v299
        %v472 = vpop.f32.mrb[0].mxu0
        %v473 = vadd.f32 %v321, %v472
        %v474 = vpop.f32.mrb[0].mxu0
        %v475 = vadd.f32 %v325, %v474
        %v476 = vpop.f32.mrb[0].mxu0
        %v477 = vpop.f32.mrb[0].mxu0
        %478 = vdwg.mxu0
        %v479 = vmax.f32 %v443, 0.0
        %v480 = vmax.f32 %v445, 0.0
        %v481 = vmax.f32 %v447, 0.0
        %v482 = vmax.f32 %v449, 0.0
        %v483 = vmax.f32 %v453, 0.0
        %v484 = vmax.f32 %v455, 0.0
        %v485 = vmax.f32 %v457, 0.0
        %v486 = vmax.f32 %v459, 0.0
        %v487 = vmax.f32 %v463, 0.0
        %v488 = vmax.f32 %v465, 0.0
        %v489 = vmax.f32 %v467, 0.0
        %v490 = vmax.f32 %v469, 0.0
        %v491 = vmax.f32 %v473, 0.0
        %v492 = vmax.f32 %v475, 0.0
        %v493 = vpack.c.bf16 %v481, %v479
        %v494 = vpack.c.bf16 %v482, %v480
        %v495 = vpack.c.bf16 %v485, %v483
        %v496 = vpack.c.bf16 %v486, %v484
        %v497 = vpack.c.bf16 %v489, %v487
        %v498 = vpack.c.bf16 %v490, %v488
        %v499 = vpack.c.bf16 %v491, %v491
        %v500 = vpack.c.bf16 %v492, %v492
        %v501 = vld [vmem:[#allocation7] sm:$0xf]
        %v502 = vld [vmem:[#allocation7 + $0x4] sm:$0xf]
        %v503 = vld [vmem:[#allocation7 + $0x8] sm:$0xf]
        %v504 = vld [vmem:[#allocation7 + $0xc] sm:$0xf]
        %v505 = vld [vmem:[#allocation7 + $0x10] sm:$0xf]
        %v506 = vld [vmem:[#allocation7 + $0x14] sm:$0xf]
        %v507 = vld [vmem:[#allocation7 + $0x18] sm:$0xf]
        %v508 = vld [vmem:[#allocation7 + $0x1c] sm:$0xf]
        %v509 = vld [vmem:[#allocation7 + $0x20] sm:$0xf]
        %v510 = vld [vmem:[#allocation7 + $0x24] sm:$0xf]
        %v511 = vld [vmem:[#allocation7 + $0x28] sm:$0xf]
        %v512 = vld [vmem:[#allocation7 + $0x2c] sm:$0xf]
        %v513 = vld [vmem:[#allocation7 + $0x30] sm:$0xf]
        %v514 = vld [vmem:[#allocation7 + $0x34] sm:$0xf]
        %v515 = vld [vmem:[#allocation7 + $0x38] sm:$0xf]
        %v516 = vld [vmem:[#allocation7 + $0x3c] sm:$0xf]
        %v517 = vld [vmem:[#allocation7 + $0x40] sm:$0xf]
        %v518 = vld [vmem:[#allocation7 + $0x44] sm:$0xf]
        %v519 = vld [vmem:[#allocation7 + $0x48] sm:$0xf]
        %v520 = vld [vmem:[#allocation7 + $0x4c] sm:$0xf]
        %v521 = vld [vmem:[#allocation7 + $0x50] sm:$0xf]
        %v522 = vld [vmem:[#allocation7 + $0x54] sm:$0xf]
        %v523 = vld [vmem:[#allocation7 + $0x58] sm:$0xf]
        %v524 = vld [vmem:[#allocation7 + $0x5c] sm:$0xf]
        %v525 = vld [vmem:[#allocation7 + $0x60] sm:$0xf]
        %v526 = vld [vmem:[#allocation7 + $0x64] sm:$0xf]
        %v527 = vld [vmem:[#allocation7 + $0x68] sm:$0xf]
        %v528 = vld [vmem:[#allocation7 + $0x6c] sm:$0xf]
        %v529 = vld [vmem:[#allocation7 + $0x70] sm:$0xf]
        %v530 = vld [vmem:[#allocation7 + $0x74] sm:$0xf]
        %v531 = vld [vmem:[#allocation7 + $0x78] sm:$0xf]
        %v532 = vld [vmem:[#allocation7 + $0x7c] sm:$0xf]
        %v533 = vld [vmem:[%s4] sm:$0x1]
        %v535 = vlaneseq
        %v536 = vshrl.u32 %v535, 7
        %v537 = vsub.s32 0, %v536
        %v538 = vrot.slane %v533, %v537
        %v572 = vunpack.c.l.b16 %v501
        %v573 = vunpack.c.l.b16 %v502
        %v574 = vunpack.c.l.b16 %v503
        %v575 = vunpack.c.l.b16 %v504
        %v576 = vunpack.c.l.b16 %v505
        %v577 = vunpack.c.l.b16 %v506
        %v578 = vunpack.c.l.b16 %v507
        %v579 = vunpack.c.l.b16 %v508
        %v580 = vunpack.c.l.b16 %v509
        %v581 = vunpack.c.l.b16 %v510
        %v582 = vunpack.c.l.b16 %v511
        %v583 = vunpack.c.l.b16 %v512
        %v584 = vunpack.c.l.b16 %v513
        %v585 = vunpack.c.l.b16 %v514
        %v586 = vunpack.c.l.b16 %v515
        %v587 = vunpack.c.l.b16 %v516
        %v588 = vunpack.c.l.b16 %v517
        %v589 = vunpack.c.l.b16 %v518
        %v590 = vunpack.c.l.b16 %v519
        %v591 = vunpack.c.l.b16 %v520
        %v592 = vunpack.c.l.b16 %v521
        %v593 = vunpack.c.l.b16 %v522
        %v594 = vunpack.c.l.b16 %v523
        %v595 = vunpack.c.l.b16 %v524
        %v596 = vunpack.c.l.b16 %v525
        %v597 = vunpack.c.l.b16 %v526
        %v598 = vunpack.c.l.b16 %v527
        %v599 = vunpack.c.l.b16 %v528
        %v600 = vunpack.c.l.b16 %v529
        %v601 = vunpack.c.l.b16 %v530
        %v602 = vunpack.c.l.b16 %v531
        %v603 = vunpack.c.l.b16 %v532
        %v604 = vpack.c.b16 %v573, %v572
        %v605 = vpack.c.b16 %v575, %v574
        %v606 = vpack.c.b16 %v577, %v576
        %v607 = vpack.c.b16 %v579, %v578
        %v608 = vpack.c.b16 %v581, %v580
        %v609 = vpack.c.b16 %v583, %v582
        %v610 = vpack.c.b16 %v585, %v584
        %v611 = vpack.c.b16 %v587, %v586
        %v612 = vpack.c.b16 %v589, %v588
        %v613 = vpack.c.b16 %v591, %v590
        %v614 = vpack.c.b16 %v593, %v592
        %v615 = vpack.c.b16 %v595, %v594
        %v616 = vpack.c.b16 %v597, %v596
        %v617 = vpack.c.b16 %v599, %v598
        %v618 = vpack.c.b16 %v601, %v600
        %v619 = vpack.c.b16 %v603, %v602
        %636 = vmatprep.subr.bf16.mxu0 0
        %637 = vmatpush1.bf16.msra.mxu0 %v604
        %638 = vmatprep.subr.bf16.mxu0 0
        %639 = vmatpush1.bf16.msra.mxu0 %v605
        %640 = vmatprep.subr.bf16.mxu0 0
        %641 = vmatpush1.bf16.msra.mxu0 %v606
        %642 = vmatprep.subr.bf16.mxu0 0
        %643 = vmatpush1.bf16.msra.mxu0 %v607
        %644 = vmatprep.subr.bf16.mxu0 0
        %645 = vmatpush1.bf16.msra.mxu0 %v608
        %646 = vmatprep.subr.bf16.mxu0 0
        %647 = vmatpush1.bf16.msra.mxu0 %v609
        %648 = vmatprep.subr.bf16.mxu0 0
        %649 = vmatpush1.bf16.msra.mxu0 %v610
        %650 = vmatprep.subr.bf16.mxu0 0
        %651 = vmatpush1.bf16.msra.mxu0 %v611
        %652 = vmatprep.subr.bf16.mxu0 0
        %653 = vmatpush1.bf16.msra.mxu0 %v612
        %654 = vmatprep.subr.bf16.mxu0 0
        %655 = vmatpush1.bf16.msra.mxu0 %v613
        %656 = vmatprep.subr.bf16.mxu0 0
        %657 = vmatpush1.bf16.msra.mxu0 %v614
        %658 = vmatprep.subr.bf16.mxu0 0
        %659 = vmatpush1.bf16.msra.mxu0 %v615
        %660 = vmatprep.subr.bf16.mxu0 0
        %661 = vmatpush1.bf16.msra.mxu0 %v616
        %662 = vmatprep.subr.bf16.mxu0 0
        %663 = vmatpush1.bf16.msra.mxu0 %v617
        %664 = vmatprep.subr.bf16.mxu0 0
        %665 = vmatpush1.bf16.msra.mxu0 %v618
        %666 = vmatprep.subr.bf16.mxu0 0
        %667 = vmatpush1.bf16.msra.mxu0 %v619
        %668 = vmatprep.mubr.bf16.mxu0 %v494
        %669 = vmatmul.mubr.bf16.gmra.mrb[0].mxu0 %v493
        %v670 = vpop.f32.mrb[0].mxu0
        %v671 = vadd.f32 %v538, %v670
        %v672 = vpop.f32.mrb[0].mxu0
        %v673 = vpop.f32.mrb[0].mxu0
        %v674 = vadd.f32 %v538, %v673
        %v675 = vpop.f32.mrb[0].mxu0
        %676 = vmatprep.mubr.bf16.mxu0 %v496
        %677 = vmatmul.mubr.bf16.gmra.mrb[0].mxu0 %v495
        %v678 = vpop.f32.mrb[0].mxu0
        %v679 = vadd.f32 %v538, %v678
        %v680 = vpop.f32.mrb[0].mxu0
        %v681 = vpop.f32.mrb[0].mxu0
        %v682 = vadd.f32 %v538, %v681
        %v683 = vpop.f32.mrb[0].mxu0
        %684 = vmatprep.mubr.bf16.mxu0 %v498
        %685 = vmatmul.mubr.bf16.gmra.mrb[0].mxu0 %v497
        %v686 = vpop.f32.mrb[0].mxu0
        %v687 = vadd.f32 %v538, %v686
        %v688 = vpop.f32.mrb[0].mxu0
        %v689 = vpop.f32.mrb[0].mxu0
        %v690 = vadd.f32 %v538, %v689
        %v691 = vpop.f32.mrb[0].mxu0
        %692 = vmatprep.mubr.bf16.mxu0 %v500
        %693 = vmatmul.mubr.bf16.gmra.mrb[0].mxu0 %v499
        %v694 = vpop.f32.mrb[0].mxu0
        %v695 = vadd.f32 %v538, %v694
        %v696 = vpop.f32.mrb[0].mxu0
        %v697 = vpop.f32.mrb[0].mxu0
        %v698 = vpop.f32.mrb[0].mxu0
        %699 = vdwg.mxu0
        %700 = vst [vmem:[%s277] sm:$0xff] %v671
        %701 = vst [vmem:[%s277 + $0x8] sm:$0xff] %v674
        %702 = vst [vmem:[%s277 + $0x10] sm:$0xff] %v679
        %703 = vst [vmem:[%s277 + $0x18] sm:$0xff] %v682
        %704 = vst [vmem:[%s277 + $0x20] sm:$0xff] %v687
        %705 = vst [vmem:[%s277 + $0x28] sm:$0xff] %v690
        %706 = vst [vmem:[%s277 + $0x30] sm:$0xff] %v695
        %s707 = sand.u32 %s141, 1
        %s708 = scalar_lea.sflag [#allocation4], %s707
        %s709 = sand.u32 %s141, 1
        %s710 = smul.addr %s709, 56
        %s711 = scalar_lea.vmem [#allocation8], %s710
        // Predicated region
        $region53: #{tpu_custom_call.1} parent=39 // pred_check
          %p712 = pneg %p151
        $region54: #{tpu_custom_call.1} parent=39 // pred_check_branch
          %714 = sbr.rel (%p712) target = $region56
        $region55: #{tpu_custom_call.1} parent=39 // pred_region
          %s715 = smul.u32 7, %s23
          %s716 = ssub.s32 13, %s715
          %p717 = scmp.lt.s32.totalorder %s716, 7
          %s718 = scalar_select %p717, %s716, 7
          %s719 = smul.u32 128, %s718
          %s721 = ssub.s32 896, %s719
          %722 = vsyncadd %s708, %s721
          %p723 = scmp.ne.s32.totalorder 0, %s719
          %s724 = smul.addr %s715, 128
          %s725 = scalar_lea.hbm %s5, %s724
          %s726 = smul.u32 8, %s718
          %s727 = sshll.u32 %s711, 4
          %s728 = int_to_ptr.vmem [resolvable:$true] %s727
          %s729 = sshll.u32 %s726, 4
          %733 = dma.vmem_to_hbm [thread:$0]  (%p723), %s728, %s729, %s725, %s708, 128, 128, 8
        $region56: #{tpu_custom_call.1} parent=39 // pred_fallthru
          _
      $region40: #{tpu_custom_call.1} parent=5 // pred_fallthru
        _
      %p734 = scmp.le.s32.totalorder 2, %s18
      // Predicated region
      $region57: #{tpu_custom_call.1} parent=5 // pred_check
        %p735 = pneg %p734
      $region58: #{tpu_custom_call.1} parent=5 // pred_check_branch
        %737 = sbr.rel (%p735) target = $region60
      $region59: #{tpu_custom_call.1} parent=5 // pred_region
        %s738 = ssub.s32 %s18, 2
        // Predicated region
        $region61: #{tpu_custom_call.1} parent=59 // pred_check
          %p739 = pneg %p157
        $region62: #{tpu_custom_call.1} parent=59 // pred_check_branch
          %741 = sbr.rel (%p739) target = $region64
        $region63: #{tpu_custom_call.1} parent=59 // pred_region
          %s742 = sand.u32 %s142, 1
          %s743 = scalar_lea.sflag [#allocation4], %s742
          %s744 = sand.u32 %s142, 1
          %s745 = smul.addr %s744, 56
          %s746 = scalar_lea.vmem [#allocation8], %s745
          %747 = dma.done %s743, 896
        $region64: #{tpu_custom_call.1} parent=59 // pred_fallthru
          _
      $region60: #{tpu_custom_call.1} parent=5 // pred_fallthru
        _
    $region6: #{tpu_custom_call.1} parent=1 // loop_footer
      %s22 = sadd.s32 1, %s18
    $region7: #{tpu_custom_call.1} parent=1 // loop_footer_branch
      %17 = sbr.rel target = $region3
    $region8: #{tpu_custom_call.1} parent=1 // loop_exit
      _
    %748 = vsyncpa [#allocation3], 1
    %s749 = scalar_lea.sflag [#allocation3], 1
    %750 = vsyncpa %s749, 1
    %751 = vsyncpa [#allocation6], 1
    %752 = vsyncpa [#allocation4], 1
    %s753 = scalar_lea.sflag [#allocation4], 1
    %754 = vsyncpa %s753, 1

</llo_original>
